<compile_context>
chip_gen: v5e
topology: v5e:2x2
jax: 0.10.0
libtpu: 0.0.40
codegen_flags: <defaults>
</compile_context>

<pallas_src>
import functools

import jax
import jax.numpy as jnp
from jax import lax
from jax.experimental import pallas as pl
from jax.experimental.pallas import tpu as pltpu

BATCH_SIZE = 8           # small test batch (module default is 512)
FEAT_DIM = 128           # keep D a multiple of 128 (lane-dense layout)
TEMPERATURE = 0.5
USE_COSINE_SIMILARITY = True
COSINE_EPS = 1e-8        # torch.nn.CosineSimilarity default eps
_NEG_BIG = -1e30         # finite "-inf" for the diagonal mask


def _normalize(x, use_cosine):
    if not use_cosine:
        return x
    # x / max(||x||, eps)  (clamp per-row norm before rsqrt; identical to the
    # torch max(||a||*||b||, eps) semantics for non-degenerate inputs).
    ss = jnp.sum(x * x, axis=-1, keepdims=True)
    return x * lax.rsqrt(jnp.maximum(ss, jnp.float32(COSINE_EPS * COSINE_EPS)))


def _ntxent_kernel(rows_ref, full_ref, out_ref, *, batch_size, temperature,
                   block_rows, use_cosine, mxu_dtype):
    n = full_ref.shape[0]
    tm = block_rows
    inv_t = jnp.float32(1.0 / temperature)

    i = pl.program_id(0)
    row_start = i * tm

    # --- normalize once per operand; fold 1/temperature into the LHS ---
    full_hat = _normalize(full_ref[...], use_cosine)           # (N, D)
    rows_hat = _normalize(rows_ref[...], use_cosine)           # (TM, D)
    rows_scaled = rows_hat * inv_t                             # carries 1/T

    # --- logits block (TM, N): contract feature dims, no explicit transpose ---
    logits = lax.dot_general(
        rows_scaled.astype(mxu_dtype), full_hat.astype(mxu_dtype),
        dimension_numbers=(((1,), (1,)), ((), ())),
        preferred_element_type=jnp.float32)                    # (TM, N) f32

    # --- positives: partner rows (i + B) mod N; contiguous because TM | B ---
    partner_start = jnp.where(row_start >= batch_size,
                              row_start - batch_size,
                              row_start + batch_size)
    partner_start = pl.multiple_of(partner_start, tm)
    partner_hat = _normalize(full_ref[pl.ds(partner_start, tm), :], use_cosine)
    positives = jnp.sum(rows_scaled * partner_hat, axis=-1, keepdims=True)  # (TM,1)

    # --- mask only the diagonal (global row == column), then log-sum-exp ---
    local_row = lax.broadcasted_iota(jnp.int32, (tm, n), 0)
    col = lax.broadcasted_iota(jnp.int32, (tm, n), 1)
    masked = jnp.where(col == local_row + row_start, _NEG_BIG, logits)
    m = jnp.max(masked, axis=-1, keepdims=True)
    lse = m + jnp.log(jnp.sum(jnp.exp(masked - m), axis=-1, keepdims=True))  # (TM,1)

    partial = jnp.sum(lse - positives)
    # Lane/sublane-aligned (1, 8, 128) partial-loss block; wrapper reads [0,0,0].
    out_ref[...] = jnp.full(out_ref.shape, partial, dtype=jnp.float32)


def ntxent_loss(zis, zjs, *, batch_size=None, temperature=TEMPERATURE,
                use_cosine=USE_COSINE_SIMILARITY, block_rows=128,
                mxu_dtype=jnp.float32):
    if batch_size is None:
        batch_size = zis.shape[0]
    # Concatenate the two views (same order as torch: [zjs, zis]).
    reps = jnp.concatenate([zjs, zis], axis=0).astype(jnp.float32)  # (N, D)
    n, d = reps.shape
    assert n == 2 * batch_size

    tm = min(block_rows, batch_size)
    assert batch_size % tm == 0 and tm % 8 == 0, (batch_size, tm)
    nb = n // tm

    kernel = functools.partial(
        _ntxent_kernel, batch_size=batch_size, temperature=temperature,
        block_rows=tm, use_cosine=use_cosine, mxu_dtype=mxu_dtype)

    partials = pl.pallas_call(
        kernel,
        out_shape=jax.ShapeDtypeStruct((nb, 8, 128), jnp.float32),
        grid_spec=pltpu.PrefetchScalarGridSpec(
            num_scalar_prefetch=0,
            grid=(nb,),
            in_specs=[
                pl.BlockSpec((tm, d), lambda i: (i, 0)),   # row block (pipelined)
                pl.BlockSpec((n, d), lambda i: (0, 0)),    # full reps (resident)
            ],
            out_specs=pl.BlockSpec((1, 8, 128), lambda i: (i, 0, 0)),
        ),
        compiler_params=pltpu.CompilerParams(
            dimension_semantics=("parallel",)),              # 2x on v7x megacore
    )(reps, reps)
    return jnp.sum(partials[:, 0, 0]) / jnp.float32(n)


def _reference(zis, zjs, batch_size, temperature):
    # Pure-JAX reference mirroring the PyTorch module semantics.
    reps = jnp.concatenate([zjs, zis], axis=0).astype(jnp.float32)
    norm = jnp.linalg.norm(reps, axis=-1, keepdims=True)
    sim = (reps @ reps.T) / jnp.maximum(norm * norm.T, COSINE_EPS)
    n = 2 * batch_size
    logits = sim / temperature
    idx = jnp.arange(n)
    positives = logits[idx, (idx + batch_size) % n]
    masked = jnp.where(jnp.eye(n, dtype=bool), -jnp.inf, logits)
    lse = jax.scipy.special.logsumexp(masked, axis=-1)
    return jnp.sum(lse - positives) / n


if __name__ == "__main__":
    key = jax.random.PRNGKey(0)
    k1, k2 = jax.random.split(key)
    zis = jax.random.normal(k1, (BATCH_SIZE, FEAT_DIM), dtype=jnp.float32)
    zjs = jax.random.normal(k2, (BATCH_SIZE, FEAT_DIM), dtype=jnp.float32)

    loss = jax.block_until_ready(ntxent_loss(zis, zjs))
    ref = jax.block_until_ready(_reference(zis, zjs, BATCH_SIZE, TEMPERATURE))

    assert jnp.isfinite(loss), "kernel produced non-finite loss"
    assert abs(float(loss) - float(ref)) < 1e-4, (float(loss), float(ref))
    print("KERNEL_OK")
</pallas_src>

<mosaic_0001>
module attributes {stable_mosaic.version = 11 : i64} {
  func.func @_ntxent_kernel(%arg0: i32, %arg1: memref<8x128xf32, #tpu.memory_space<vmem>>, %arg2: memref<16x128xf32, #tpu.memory_space<vmem>>, %arg3: memref<1x8x128xf32, #tpu.memory_space<vmem>>) attributes {dimension_semantics = [#tpu.dimension_semantics<parallel>], iteration_bounds = array<i64: 2>, scalar_prefetch = 0 : i64, scratch_operands = 0 : i64, tpu.core_type = #tpu.core_type<tc>, window_params = [{transform_indices = @transform_0, window_bounds = array<i64: 8, 128>}, {pipeline_mode = #tpu.pipeline_mode<synchronous>, transform_indices = @transform_1, window_bounds = array<i64: 16, 128>}, {transform_indices = @transform_2, window_bounds = array<i64: 1, 8, 128>}]} {
    %c8_i32 = arith.constant 8 : i32
    %0 = arith.muli %arg0, %c8_i32 : i32
    %c0 = arith.constant 0 : index
    %c0_0 = arith.constant 0 : index
    %1 = vector.load %arg2[%c0, %c0_0] : memref<16x128xf32, #tpu.memory_space<vmem>>, vector<16x128xf32>
    %2 = arith.mulf %1, %1 : vector<16x128xf32>
    %cst = arith.constant dense<0.000000e+00> : vector<16xf32>
    %3 = vector.multi_reduction <add>, %2, %cst [1] : vector<16x128xf32> to vector<16xf32>
    %4 = vector.shape_cast %3 : vector<16xf32> to vector<16x1xf32>
    %cst_1 = arith.constant 1.000000e-16 : f32
    %5 = vector.broadcast %cst_1 : f32 to vector<16x1xf32>
    %6 = arith.maximumf %4, %5 : vector<16x1xf32>
    %7 = math.rsqrt %6 : vector<16x1xf32>
    %8 = vector.broadcast %7 : vector<16x1xf32> to vector<16x128xf32>
    %9 = arith.mulf %1, %8 : vector<16x128xf32>
    %c0_2 = arith.constant 0 : index
    %c0_3 = arith.constant 0 : index
    %10 = vector.load %arg1[%c0_2, %c0_3] : memref<8x128xf32, #tpu.memory_space<vmem>>, vector<8x128xf32>
    %11 = arith.mulf %10, %10 : vector<8x128xf32>
    %cst_4 = arith.constant dense<0.000000e+00> : vector<8xf32>
    %12 = vector.multi_reduction <add>, %11, %cst_4 [1] : vector<8x128xf32> to vector<8xf32>
    %13 = vector.shape_cast %12 : vector<8xf32> to vector<8x1xf32>
    %cst_5 = arith.constant 1.000000e-16 : f32
    %14 = vector.broadcast %cst_5 : f32 to vector<8x1xf32>
    %15 = arith.maximumf %13, %14 : vector<8x1xf32>
    %16 = math.rsqrt %15 : vector<8x1xf32>
    %17 = vector.broadcast %16 : vector<8x1xf32> to vector<8x128xf32>
    %18 = arith.mulf %10, %17 : vector<8x128xf32>
    %cst_6 = arith.constant 2.000000e+00 : f32
    %19 = vector.broadcast %cst_6 : f32 to vector<8x128xf32>
    %20 = arith.mulf %18, %19 : vector<8x128xf32>
    %cst_7 = arith.constant dense<0.000000e+00> : vector<8x16xf32>
    %21 = tpu.matmul %20, %9, %cst_7 {dimension_numbers = #tpu.dot_dimension_numbers<[1], [1], [0], [0], [0, 0, 1, 0], [], []>} : vector<8x128xf32>, vector<16x128xf32>, vector<8x16xf32> -> vector<8x16xf32>
    %c8_i32_8 = arith.constant 8 : i32
    %22 = arith.cmpi sge, %0, %c8_i32_8 : i32
    %c8_i32_9 = arith.constant 8 : i32
    %23 = arith.subi %0, %c8_i32_9 : i32
    %c8_i32_10 = arith.constant 8 : i32
    %24 = arith.addi %0, %c8_i32_10 : i32
    %25 = arith.select %22, %23, %24 : i32
    %26 = tpu.assume_multiple %25, 8 : i32
    %27 = arith.index_cast %26 : i32 to index
    %c0_11 = arith.constant 0 : index
    %28 = vector.load %arg2[%27, %c0_11] : memref<16x128xf32, #tpu.memory_space<vmem>>, vector<8x128xf32>
    %29 = arith.mulf %28, %28 : vector<8x128xf32>
    %cst_12 = arith.constant dense<0.000000e+00> : vector<8xf32>
    %30 = vector.multi_reduction <add>, %29, %cst_12 [1] : vector<8x128xf32> to vector<8xf32>
    %31 = vector.shape_cast %30 : vector<8xf32> to vector<8x1xf32>
    %cst_13 = arith.constant 1.000000e-16 : f32
    %32 = vector.broadcast %cst_13 : f32 to vector<8x1xf32>
    %33 = arith.maximumf %31, %32 : vector<8x1xf32>
    %34 = math.rsqrt %33 : vector<8x1xf32>
    %35 = vector.broadcast %34 : vector<8x1xf32> to vector<8x128xf32>
    %36 = arith.mulf %28, %35 : vector<8x128xf32>
    %37 = arith.mulf %20, %36 : vector<8x128xf32>
    %cst_14 = arith.constant dense<0.000000e+00> : vector<8xf32>
    %38 = vector.multi_reduction <add>, %37, %cst_14 [1] : vector<8x128xf32> to vector<8xf32>
    %39 = vector.shape_cast %38 : vector<8xf32> to vector<8x1xf32>
    %40 = tpu.iota {dimensions = array<i32: 0>} : vector<8x16xi32>
    %41 = tpu.iota {dimensions = array<i32: 1>} : vector<8x16xi32>
    %42 = vector.broadcast %0 : i32 to vector<8x16xi32>
    %43 = arith.addi %40, %42 : vector<8x16xi32>
    %44 = arith.cmpi eq, %41, %43 : vector<8x16xi32>
    %cst_15 = arith.constant -1.000000e+30 : f32
    %45 = vector.broadcast %cst_15 : f32 to vector<8x16xf32>
    %46 = arith.select %44, %45, %21 : vector<8x16xi1>, vector<8x16xf32>
    %cst_16 = arith.constant dense<0xFF800000> : vector<8xf32>
    %47 = vector.multi_reduction <maximumf>, %46, %cst_16 [1] : vector<8x16xf32> to vector<8xf32>
    %48 = vector.shape_cast %47 : vector<8xf32> to vector<8x1xf32>
    %49 = vector.broadcast %48 : vector<8x1xf32> to vector<8x16xf32>
    %50 = arith.subf %46, %49 : vector<8x16xf32>
    %51 = math.exp %50 : vector<8x16xf32>
    %cst_17 = arith.constant dense<0.000000e+00> : vector<8xf32>
    %52 = vector.multi_reduction <add>, %51, %cst_17 [1] : vector<8x16xf32> to vector<8xf32>
    %53 = vector.shape_cast %52 : vector<8xf32> to vector<8x1xf32>
    %54 = math.log %53 : vector<8x1xf32>
    %55 = arith.addf %48, %54 : vector<8x1xf32>
    %56 = arith.subf %55, %39 : vector<8x1xf32>
    %57 = vector.shape_cast %56 : vector<8x1xf32> to vector<1x8x1xf32>
    %cst_18 = arith.constant dense<0.000000e+00> : vector<1xf32>
    %58 = vector.multi_reduction <add>, %57, %cst_18 [1, 2] : vector<1x8x1xf32> to vector<1xf32>
    %59 = vector.shape_cast %58 : vector<1xf32> to vector<1x1x1xf32>
    %60 = vector.extract %59[0, 0, 0] : f32 from vector<1x1x1xf32>
    %61 = vector.broadcast %60 : f32 to vector<1x8x128xf32>
    %c0_19 = arith.constant 0 : index
    %c0_20 = arith.constant 0 : index
    %c0_21 = arith.constant 0 : index
    %62 = vector.load %arg3[%c0_19, %c0_20, %c0_21] : memref<1x8x128xf32, #tpu.memory_space<vmem>>, vector<1x8x128xf32>
    tpu.vector_store %arg3[%c0_19, %c0_20, %c0_21], %61 {strides = array<i32>} : memref<1x8x128xf32, #tpu.memory_space<vmem>>, vector<1x8x128xf32>,
    return
  }
  func.func @transform_0(%arg0: i32) -> (i32, i32) {
    %c0_i32 = arith.constant 0 : i32
    %c0_i32_0 = arith.constant 0 : i32
    return %arg0, %c0_i32 : i32, i32
  }
  func.func @transform_1(%arg0: i32) -> (i32, i32) {
    %c0_i32 = arith.constant 0 : i32
    %c0_i32_0 = arith.constant 0 : i32
    %c0_i32_1 = arith.constant 0 : i32
    return %c0_i32, %c0_i32_0 : i32, i32
  }
  func.func @transform_2(%arg0: i32) -> (i32, i32, i32) {
    %c0_i32 = arith.constant 0 : i32
    %c0_i32_0 = arith.constant 0 : i32
    %c0_i32_1 = arith.constant 0 : i32
    return %arg0, %c0_i32, %c0_i32_0 : i32, i32, i32
  }
}

</mosaic_0001>

<llo_original>
// kernel: tpu_custom_call.1
$region0: #{tpu_custom_call.1}
  #allocation0 [shape = 'u32[]', space=smem, size = 0x4, offset = 0x4, fixed_abs, tag = 'smem constant byte address 0x4 - core index']
  #allocation1 [shape = 'u32[72,128]{1,0:T(1,128)}', space=vmem, size = 0x9000, scoped, tag = 'internal scratch']
  %s0 = inlined_call_operand.hbm [shape: f32[16,128], index: 0, kind: input, shape index: {}]
  %s1 = inlined_call_operand.hbm [shape: f32[16,128], index: 1, kind: input, shape index: {}]
  %s2 = inlined_call_operand.hbm [shape: f32[2,8,128], index: 2, kind: output, shape index: {}]
  %s3 = sld [smem:[#allocation0]]
  $region49: #{tpu_custom_call.1} parent=0
    _
  %s5 = ssub.s32 1, %s3
  %s6 = scalar_select 0, %s5, %s3
  $region1: #{tpu_custom_call.1} parent=0
    #allocation2 [shape = 'u8[8192]{0}', space=vmem, size = 0x2000, scoped, tag = 'input window, operand 0']
    #allocation3 [shape = 's32[2]{0}', space=sflag, size = 0x8, scoped, tag = 'scoped memory for tpu_custom_call.1']
    #allocation4 [shape = 's32[2]{0}', space=sflag, size = 0x8, scoped, tag = 'scoped memory for tpu_custom_call.1']
    #allocation5 [shape = 'u8[8192]{0}', space=vmem, size = 0x2000, scoped, tag = 'input window, operand 1, single buffered']
    #allocation6 [shape = 's32[1]{0}', space=sflag, size = 0x4, scoped, tag = 'scoped memory for tpu_custom_call.1']
    #allocation7 [shape = 'u8[8192]{0}', space=vmem, size = 0x2000, scoped, tag = 'output window, operand 0']
    %7 = vsyncpa [#allocation3], 0
    %s8 = scalar_lea.sflag [#allocation3], 1
    %9 = vsyncpa %s8, 0
    %10 = vsyncpa [#allocation6], 0
    %11 = vsyncpa [#allocation4], 0
    %s12 = scalar_lea.sflag [#allocation4], 1
    %13 = vsyncpa %s12, 0
    loop: start=0, step=1, limit=4
    $region2: #{tpu_custom_call.1} parent=1 // loop_pre_header
      _
    $region3: #{tpu_custom_call.1} parent=1 // loop_header
      %s15 = sphi 0, %s19
      %p16 = scmp.ge.s32.totalorder %s15, 4
      %s25 = sphi 0, %s27
      %s28 = sphi 0, %s25
      %s29 = sphi 0, %s28
      %s45 = sphi 0, %s29
      %s49 = sphi 0, %s49
      %s51 = sphi 0, %s49
      %s52 = sphi 0, %s51
      %s66 = sphi 0, %s52
      %s72 = sphi 0, %s74
      %s75 = sphi 0, %s72
      %s76 = sphi 0, %s75
      %s92 = sphi 0, %s76
    $region4: #{tpu_custom_call.1} parent=1 // loop_header_branch
      %18 = sbr.rel (%p16) target = $region8
    $region5: #{tpu_custom_call.1} parent=1 // loop_body
      %s20 = ssub.s32 %s15, 1
      %s21 = ssub.s32 %s15, 2
      %s22 = sadd.s32 %s15, 1
      %s23 = ssub.s32 %s15, %s22
      %p24 = scmp.eq.s32.totalorder %s23, 0
      %s26 = sadd.s32 %s25, 1
      %s27 = scalar_select %p24, %s25, %s26
      %p30 = pneg %p24
      %p31 = scmp.eq.s32.totalorder %s15, 1
      %p32 = por %p30, %p31
      %p33 = scmp.ne.s32.totalorder %s25, %s28
      %p34 = scmp.eq.s32.totalorder %s15, 0
      %p35 = por %p33, %p34
      %p36 = scmp.ne.s32.totalorder %s25, %s28
      %p37 = scmp.eq.s32.totalorder %s20, 1
      %p38 = por %p36, %p37
      %p39 = scmp.ne.s32.totalorder %s28, %s29
      %p40 = scmp.eq.s32.totalorder %s20, 0
      %p41 = por %p39, %p40
      %p42 = scmp.ne.s32.totalorder %s28, %s29
      %p43 = scmp.eq.s32.totalorder %s21, 1
      %p44 = por %p42, %p43
      %p46 = scmp.ne.s32.totalorder %s29, %s45
      %p47 = scmp.eq.s32.totalorder %s21, 0
      %p48 = por %p46, %p47
      %s50 = sadd.s32 %s49, 1
      %p53 = scmp.eq.s32.totalorder %s15, 1
      %p54 = scmp.ne.s32.totalorder %s49, %s51
      %p55 = scmp.eq.s32.totalorder %s15, 0
      %p56 = por %p54, %p55
      %p57 = scmp.ne.s32.totalorder %s49, %s51
      %p58 = scmp.eq.s32.totalorder %s20, 1
      %p59 = por %p57, %p58
      %p60 = scmp.ne.s32.totalorder %s51, %s52
      %p61 = scmp.eq.s32.totalorder %s20, 0
      %p62 = por %p60, %p61
      %p63 = scmp.ne.s32.totalorder %s51, %s52
      %p64 = scmp.eq.s32.totalorder %s21, 1
      %p65 = por %p63, %p64
      %p67 = scmp.ne.s32.totalorder %s52, %s66
      %p68 = scmp.eq.s32.totalorder %s21, 0
      %p69 = por %p67, %p68
      %s70 = ssub.s32 %s15, %s22
      %p71 = scmp.eq.s32.totalorder %s70, 0
      %s73 = sadd.s32 %s72, 1
      %s74 = scalar_select %p71, %s72, %s73
      %p77 = pneg %p71
      %p78 = scmp.eq.s32.totalorder %s15, 1
      %p79 = por %p77, %p78
      %p80 = scmp.ne.s32.totalorder %s72, %s75
      %p81 = scmp.eq.s32.totalorder %s15, 0
      %p82 = por %p80, %p81
      %p83 = scmp.ne.s32.totalorder %s72, %s75
      %p84 = scmp.eq.s32.totalorder %s20, 1
      %p85 = por %p83, %p84
      %p86 = scmp.ne.s32.totalorder %s75, %s76
      %p87 = scmp.eq.s32.totalorder %s20, 0
      %p88 = por %p86, %p87
      %p89 = scmp.ne.s32.totalorder %s75, %s76
      %p90 = scmp.eq.s32.totalorder %s21, 1
      %p91 = por %p89, %p90
      %p93 = scmp.ne.s32.totalorder %s76, %s92
      %p94 = scmp.eq.s32.totalorder %s21, 0
      %p95 = por %p93, %p94
      %p96 = scmp.le.s32.totalorder 1, %s15
      %p97 = scmp.lt.s32.totalorder %s15, 3
      %p98 = pnand %p96, %p97
      %p99 = pneg %p98
      // Predicated region
      $region9: #{tpu_custom_call.1} parent=5 // pred_check
        _
      $region10: #{tpu_custom_call.1} parent=5 // pred_check_branch
        %101 = sbr.rel (%p98) target = $region12
      $region11: #{tpu_custom_call.1} parent=5 // pred_region
        %s102 = ssub.s32 %s15, 1
        // Predicated region
        $region13: #{tpu_custom_call.1} parent=11 // pred_check
          %p103 = pneg %p62
        $region14: #{tpu_custom_call.1} parent=11 // pred_check_branch
          %105 = sbr.rel (%p103) target = $region16
        $region15: #{tpu_custom_call.1} parent=11 // pred_region
          %107 = vsyncadd [#allocation6], 0
          %s108 = sshll.u32 %s1, 4
          %s109 = int_to_ptr.hbm [resolvable:$true] %s108
          %s110 = sshll.u32 [#allocation5], 4
          %s111 = int_to_ptr.vmem [resolvable:$true] %s110
          %116 = dma.hbm_to_vmem [thread:$0]  %s109, 256, %s111, [#allocation6], 128, 128, 8
        $region16: #{tpu_custom_call.1} parent=11 // pred_fallthru
          _
      $region12: #{tpu_custom_call.1} parent=5 // pred_fallthru
        _
      %p117 = scmp.lt.s32.totalorder %s15, 2
      // Predicated region
      $region17: #{tpu_custom_call.1} parent=5 // pred_check
        %p118 = pneg %p117
      $region18: #{tpu_custom_call.1} parent=5 // pred_check_branch
        %120 = sbr.rel (%p118) target = $region20
      $region19: #{tpu_custom_call.1} parent=5 // pred_region
        // Predicated region
        $region21: #{tpu_custom_call.1} parent=19 // pred_check
          %p121 = pneg %p35
        $region22: #{tpu_custom_call.1} parent=19 // pred_check_branch
          %123 = sbr.rel (%p121) target = $region24
        $region23: #{tpu_custom_call.1} parent=19 // pred_region
          %s124 = sand.u32 %s25, 1
          %s125 = scalar_lea.sflag [#allocation3], %s124
          %s126 = sand.u32 %s25, 1
          %s127 = smul.addr %s126, 8
          %s128 = scalar_lea.vmem [#allocation2], %s127
          %130 = vsyncadd %s125, 0
          %s131 = smul.addr %s15, 8
          %s132 = scalar_lea.hbm %s0, %s131
          %s134 = sshll.u32 %s132, 4
          %s135 = int_to_ptr.hbm [resolvable:$true] %s134
          %s136 = sshll.u32 %s128, 4
          %s137 = int_to_ptr.vmem [resolvable:$true] %s136
          %139 = dma.hbm_to_vmem [thread:$0]  %s135, 128, %s137, %s125
        $region24: #{tpu_custom_call.1} parent=19 // pred_fallthru
          _
      $region20: #{tpu_custom_call.1} parent=5 // pred_fallthru
        _
      %p140 = scmp.le.s32.totalorder 1, %s15
      %p141 = scmp.lt.s32.totalorder %s15, 3
      %p142 = pnand %p140, %p141
      %p143 = pneg %p142
      // Predicated region
      $region25: #{tpu_custom_call.1} parent=5 // pred_check
        _
      $region26: #{tpu_custom_call.1} parent=5 // pred_check_branch
        %145 = sbr.rel (%p142) target = $region28
      $region27: #{tpu_custom_call.1} parent=5 // pred_region
        %s146 = ssub.s32 %s15, 1
        %s147 = sand.u32 %s28, 1
        %s148 = scalar_lea.sflag [#allocation3], %s147
        %s149 = sand.u32 %s28, 1
        %s150 = smul.addr %s149, 8
        %s151 = scalar_lea.vmem [#allocation2], %s150
        // Predicated region
        $region29: #{tpu_custom_call.1} parent=27 // pred_check
          %p152 = pneg %p41
        $region30: #{tpu_custom_call.1} parent=27 // pred_check_branch
          %154 = sbr.rel (%p152) target = $region32
        $region31: #{tpu_custom_call.1} parent=27 // pred_region
          %156 = dma.done %s148, 128
        $region32: #{tpu_custom_call.1} parent=27 // pred_fallthru
          _
        // Predicated region
        $region33: #{tpu_custom_call.1} parent=27 // pred_check
          %p157 = pneg %p62
        $region34: #{tpu_custom_call.1} parent=27 // pred_check_branch
          %159 = sbr.rel (%p157) target = $region36
        $region35: #{tpu_custom_call.1} parent=27 // pred_region
          %161 = dma.done [#allocation6], 256
        $region36: #{tpu_custom_call.1} parent=27 // pred_fallthru
          _
        %s162 = sand.u32 %s28, 1
        %s163 = scalar_lea.sflag [#allocation3], %s162
        %s164 = sand.u32 %s28, 1
        %s165 = smul.addr %s164, 8
        %s166 = scalar_lea.vmem [#allocation2], %s165
        %p167 = pneg %p41
        %p168 = pneg %p38
        %p169 = pneg %p62
        %p170 = pneg %p59
        %p171 = pneg %p88
        %p172 = pneg %p85
        %s173 = sand.u32 %s75, 1
        %s174 = scalar_lea.sflag [#allocation4], %s173
        %s175 = sand.u32 %s75, 1
        %s176 = smul.addr %s175, 8
        %s177 = scalar_lea.vmem [#allocation7], %s176
        %s178 = smul.u32 %s20, 8
        %v179 = vld [vmem:[#allocation5] sm:$0xff]
        %v180 = vld [vmem:[#allocation5 + $0x8] sm:$0xff]
        %v181 = vmul.f32 %v179, %v179
        %v182 = vmul.f32 %v180, %v180
        %183 = vadd.xlane.f32.xlu0 %v181
        %v184 = vpop.xlane.xlu0 %183
        %185 = vadd.xlane.f32.xlu0 %v182
        %v186 = vpop.xlane.xlu0 %185
        %v187 = vmax.f32 %v184, 1e-16
        %v188 = vmax.f32 %v186, 1e-16
        %v189 = vrsqrt.pop %v187
        %v190 = vmul.f32 %v189, %v187
        %v191 = vmul.f32 %v190, %v189
        %v192 = vmul.f32 0.5, %v191
        %v193 = vsub.f32 1.5, %v192
        %v194 = vmul.f32 %v189, %v193
        %vm195 = vweird.f32 %v187
        %vm196 = vweird.f32 %v189
        %vm197 = vmor %vm195, %vm196
        %v198 = vsel %vm197, %v189, %v194
        %v199 = vrsqrt.pop %v188
        %v200 = vmul.f32 %v199, %v188
        %v201 = vmul.f32 %v200, %v199
        %v202 = vmul.f32 0.5, %v201
        %v203 = vsub.f32 1.5, %v202
        %v204 = vmul.f32 %v199, %v203
        %vm205 = vweird.f32 %v188
        %vm206 = vweird.f32 %v199
        %vm207 = vmor %vm205, %vm206
        %v208 = vsel %vm207, %v199, %v204
        %v209 = vmul.f32 %v179, %v198
        %v210 = vmul.f32 %v180, %v208
        %v211 = vld [vmem:[%s151] sm:$0xff]
        %v212 = vmul.f32 %v211, %v211
        %213 = vadd.xlane.f32.xlu0 %v212
        %v214 = vpop.xlane.xlu0 %213
        %v215 = vmax.f32 %v214, 1e-16
        %v216 = vrsqrt.pop %v215
        %v217 = vmul.f32 %v216, %v215
        %v218 = vmul.f32 %v217, %v216
        %v219 = vmul.f32 0.5, %v218
        %v220 = vsub.f32 1.5, %v219
        %v221 = vmul.f32 %v216, %v220
        %vm222 = vweird.f32 %v215
        %vm223 = vweird.f32 %v216
        %vm224 = vmor %vm222, %vm223
        %v225 = vsel %vm224, %v216, %v221
        %v226 = vmul.f32 %v211, %v225
        %v227 = vmul.f32 %v226, 2.0
        %228 = vmatpush.xpose.msra.mxu0 0.0
        %229 = vmatpush.xpose.msra.mxu0 0.0
        %230 = vmatpush.xpose.msra.mxu0 0.0
        %231 = vmatpush.xpose.msra.mxu0 0.0
        %232 = vmatpush.xpose.msra.mxu0 0.0
        %233 = vmatpush.xpose.msra.mxu0 0.0
        %234 = vmatpush.xpose.msra.mxu0 0.0
        %235 = vmatpush.xpose.msra.mxu0 0.0
        %236 = vmatpush.xpose.msra.mxu0 0.0
        %237 = vmatpush.xpose.msra.mxu0 0.0
        %238 = vmatpush.xpose.msra.mxu0 0.0
        %239 = vmatpush.xpose.msra.mxu0 0.0
        %240 = vmatpush.xpose.msra.mxu0 0.0
        %241 = vmatpush.xpose.msra.mxu0 0.0
        %242 = vmatpush.xpose.msra.mxu0 %v210
        %243 = vmatpush.xpose.msra.mxu0 %v209
        %244 = vmatmul.f32.gmra.mxu0 %v227
        %v245 = vpop.f32.mrf.mxu0
        %v246 = vadd.f32 0.0, %v245
        %247 = vdwg.mxu0
        %p248 = scmp.ge.s32.totalorder %s178, 8
        %s249 = ssub.s32 %s178, 8
        %s250 = sadd.s32 %s178, 8
        %s251 = scalar_select %p248, %s249, %s250
        %s252 = scalar_lea.vmem [#allocation5], %s251
        %v253 = vld [vmem:[%s252] sm:$0xff]
        %v254 = vmul.f32 %v253, %v253
        %255 = vadd.xlane.f32.xlu0 %v254
        %v256 = vpop.xlane.xlu0 %255
        %v257 = vmax.f32 %v256, 1e-16
        %v258 = vrsqrt.pop %v257
        %v259 = vmul.f32 %v258, %v257
        %v260 = vmul.f32 %v259, %v258
        %v261 = vmul.f32 0.5, %v260
        %v262 = vsub.f32 1.5, %v261
        %v263 = vmul.f32 %v258, %v262
        %vm264 = vweird.f32 %v257
        %vm265 = vweird.f32 %v258
        %vm266 = vmor %vm264, %vm265
        %v267 = vsel %vm266, %v258, %v263
        %v268 = vmul.f32 %v253, %v267
        %v269 = vmul.f32 %v227, %v268
        %270 = vadd.xlane.f32.xlu0 %v269
        %v271 = vpop.xlane.xlu0 %270
        %v272 = vlaneseq
        %v273 = vshrl.u32 %v272, 7
        %v274 = vlaneseq
        %v275 = vand.u32 %v274, 127
        %v276 = vstv %s178
        %v277 = vadd.s32 %v273, %v276
        %vm278 = vcmp.eq.s32.totalorder %v275, %v277
        %v279 = vsel %vm278, -1e+30, %v246
        %vm280 = vcmask 130048
        %v281 = vsel %vm280, %v279, -inf
        %282 = vmax.xlane.f32.xlu0 %v281
        %v283 = vpop.xlane.xlu0 %282
        %v284 = vsub.f32 %v279, %v283
        %v285 = vmul.f32 %v284, 1.442695
        %v286 = vpow.pop %v285
        %v287 = vsel %vm280, %v286, 0.0
        %288 = vadd.xlane.f32.xlu0 %v287
        %v289 = vpop.xlane.xlu0 %288
        %v290 = vlog2.pop %v289
        %v291 = vmul.f32 %v290, 0.6931472
        %v292 = vadd.f32 %v283, %v291
        %v293 = vsub.f32 %v292, %v271
        %vm294 = vcmask 7168
        %v295 = vsel %vm294, %v293, 0.0
        %296 = vadd.xlane.f32.xlu0 %v295
        %v297 = vpop.xlane.xlu0 %296
        %v298 = vrot.slane %v297, 4
        %v299 = vadd.f32 %v297, %v298
        %v300 = vrot.slane %v299, 2
        %v301 = vadd.f32 %v299, %v300
        %v302 = vrot.slane %v301, 1
        %v303 = vadd.f32 %v301, %v302
        %s304 = vtos %v303
        %v305 = vstv %s304
        %306 = vst [vmem:[%s177] sm:$0xff] %v305
        %s307 = sand.u32 %s75, 1
        %s308 = scalar_lea.sflag [#allocation4], %s307
        %s309 = sand.u32 %s75, 1
        %s310 = smul.addr %s309, 8
        %s311 = scalar_lea.vmem [#allocation7], %s310
        // Predicated region
        $region37: #{tpu_custom_call.1} parent=27 // pred_check
          %p312 = pneg %p85
        $region38: #{tpu_custom_call.1} parent=27 // pred_check_branch
          %314 = sbr.rel (%p312) target = $region40
        $region39: #{tpu_custom_call.1} parent=27 // pred_region
          %316 = vsyncadd %s308, 0
          %s317 = smul.addr %s20, 8
          %s318 = scalar_lea.hbm %s2, %s317
          %s320 = sshll.u32 %s311, 4
          %s321 = int_to_ptr.vmem [resolvable:$true] %s320
          %s322 = sshll.u32 %s318, 4
          %s323 = int_to_ptr.hbm [resolvable:$true] %s322
          %325 = dma.vmem_to_hbm [thread:$0]  %s321, 128, %s323, %s308
        $region40: #{tpu_custom_call.1} parent=27 // pred_fallthru
          _
      $region28: #{tpu_custom_call.1} parent=5 // pred_fallthru
        _
      %p326 = scmp.le.s32.totalorder 2, %s15
      // Predicated region
      $region41: #{tpu_custom_call.1} parent=5 // pred_check
        %p327 = pneg %p326
      $region42: #{tpu_custom_call.1} parent=5 // pred_check_branch
        %329 = sbr.rel (%p327) target = $region44
      $region43: #{tpu_custom_call.1} parent=5 // pred_region
        %s330 = ssub.s32 %s15, 2
        // Predicated region
        $region45: #{tpu_custom_call.1} parent=43 // pred_check
          %p331 = pneg %p91
        $region46: #{tpu_custom_call.1} parent=43 // pred_check_branch
          %333 = sbr.rel (%p331) target = $region48
        $region47: #{tpu_custom_call.1} parent=43 // pred_region
          %s334 = sand.u32 %s76, 1
          %s335 = scalar_lea.sflag [#allocation4], %s334
          %s336 = sand.u32 %s76, 1
          %s337 = smul.addr %s336, 8
          %s338 = scalar_lea.vmem [#allocation7], %s337
          %340 = dma.done %s335, 128
        $region48: #{tpu_custom_call.1} parent=43 // pred_fallthru
          _
      $region44: #{tpu_custom_call.1} parent=5 // pred_fallthru
        _
    $region6: #{tpu_custom_call.1} parent=1 // loop_footer
      %s19 = sadd.s32 1, %s15
    $region7: #{tpu_custom_call.1} parent=1 // loop_footer_branch
      %14 = sbr.rel target = $region3
    $region8: #{tpu_custom_call.1} parent=1 // loop_exit
      _
    %341 = vsyncpa [#allocation3], 1
    %s342 = scalar_lea.sflag [#allocation3], 1
    %343 = vsyncpa %s342, 1
    %344 = vsyncpa [#allocation6], 1
    %345 = vsyncpa [#allocation4], 1
    %s346 = scalar_lea.sflag [#allocation4], 1
    %347 = vsyncpa %s346, 1

</llo_original>
